<compile_context>
chip_gen: v5e
topology: v5e:2x2
jax: 0.10.0
libtpu: 0.0.40
codegen_flags: <defaults>
</compile_context>

<pallas_src>
import math
from functools import partial

import jax
import jax.numpy as jnp
from jax.experimental import pallas as pl
from jax.experimental.pallas import tpu as pltpu


def _round_up(x, m):
    return ((x + m - 1) // m) * m


# ----------------------------------------------------------------------------
# Fused GAT-LSTM cell kernel
# ----------------------------------------------------------------------------

def _gat_lstm_kernel(x_ref, h_ref, e_ref, c_ref,
                     w_ref, wo_ref, b_ref,
                     out_ref, cn_ref, hn_ref, *, alpha, fout):
    # Single K=(na_p + fo_p + nm_p) matmul gives all 4 gate pre-activations.
    xin = jnp.concatenate([x_ref[...], h_ref[...], e_ref[...]], axis=1)
    g = jnp.dot(xin, w_ref[...], preferred_element_type=jnp.float32)

    # GAT_SRF epilogue (LeakyReLU) -- approximation, see TODO above.
    g = jnp.maximum(g, alpha * g)

    # LSTM gate math (gate order: forget, input, input_cell, output)
    f_gate = jax.nn.sigmoid(g[:, 0 * fout:1 * fout])
    i_gate = jax.nn.sigmoid(g[:, 1 * fout:2 * fout])
    c_gate = jnp.tanh(g[:, 2 * fout:3 * fout])
    o_gate = jax.nn.sigmoid(g[:, 3 * fout:4 * fout])

    cn = c_ref[...] * f_gate + i_gate * c_gate
    hn = jnp.tanh(cn) * o_gate
    cn_ref[...] = cn                      # f32 (recurrent cell state)
    hn_bf = hn.astype(jnp.bfloat16)
    hn_ref[...] = hn_bf                   # bf16 (recurrent hidden state)

    # Output projection fused in: out = hidden_new @ W + b
    out_ref[...] = (jnp.dot(hn_bf, wo_ref[...],
                            preferred_element_type=jnp.float32)
                    + b_ref[0:1, :])


# ----------------------------------------------------------------------------
# Parameters (packed + padded + bf16-cast ONCE at init)
# ----------------------------------------------------------------------------

def _xavier_uniform(key, shape, gain=1.414):
    fan_in, fan_out = shape
    bound = gain * math.sqrt(6.0 / (fan_in + fan_out))
    return jax.random.uniform(key, shape, jnp.float32, -bound, bound)


def gat_p(key, cfg):
    n_actor, n_map = cfg['n_actor'], cfg['n_map']
    fin = n_actor + n_map          # GAT_SRF in_features
    fout = n_actor                 # GAT_SRF out_features

    keys = jax.random.split(key, 10)
    # Gate order: forget, input, input_cell, output
    Ws = [_xavier_uniform(keys[i], (fin, fout)) for i in range(4)]
    Wes = [_xavier_uniform(keys[4 + i], (n_map, fout)) for i in range(4)]
    W_out = _xavier_uniform(keys[8], (fout, fout))
    b_out = _xavier_uniform(keys[9], (1, fout))

    na_p = _round_up(n_actor, 128)
    nm_p = _round_up(n_map, 128)
    fo_p = _round_up(fout, 128)
    k_p = na_p + fo_p + nm_p       # rows: [X-part | hidden-part | E-part]

    # NOTE: rows [n_actor:] of each gate W multiply `hidden` (n_actor feats),
    # which implies n_map == n_actor in this module (true for SRFNet config).
    def gate_block(i):
        blk = jnp.zeros((k_p, fo_p), jnp.float32)
        blk = blk.at[:n_actor, :fout].set(Ws[i][:n_actor])               # X-part
        blk = blk.at[na_p:na_p + n_map, :fout].set(Ws[i][n_actor:])      # hidden
        blk = blk.at[na_p + fo_p:na_p + fo_p + n_map, :fout].set(Wes[i]) # E-part
        return blk

    w_stack = jnp.concatenate([gate_block(i) for i in range(4)],
                              axis=1).astype(jnp.bfloat16)   # (k_p, 4*fo_p)

    wo = jnp.zeros((fo_p, fo_p), jnp.float32)
    wo = wo.at[:fout, :fout].set(W_out).astype(jnp.bfloat16)

    b = jnp.zeros((8, fo_p), jnp.float32)                    # f32, >=8 sublanes
    b = b.at[0, :fout].set(b_out[0])

    return {'w': w_stack, 'wo': wo, 'b': b,
            'na_p': na_p, 'nm_p': nm_p, 'fo_p': fo_p, 'k_p': k_p}


# ----------------------------------------------------------------------------
# Tiling + padded fast path (state stays padded across timesteps)
# ----------------------------------------------------------------------------

def _tiling(n_rows):
    """Return (TM, Np): TM multiple of 16; >=2 grid steps when batch allows."""
    np16 = _round_up(max(n_rows, 1), 16)
    if np16 > 512:
        tm = 512                                  # large batch: big tiles
    elif np16 >= 64:
        tm = _round_up((np16 + 1) // 2, 16)       # >=2 tiles -> both v7x TCs
    else:
        tm = np16                                 # tiny batch: single tile
    return tm, _round_up(np16, tm)


def _pad(a, rows, cols, dtype):
    a = a.astype(dtype)
    return jnp.pad(a, ((0, rows - a.shape[0]), (0, cols - a.shape[1])))


def gat_step_padded(p, cfg, xp, ep, cp, hp, tm):
    """One fused GAT-LSTM step on padded inputs/state. Returns padded outputs."""
    Np = xp.shape[0]
    na_p, nm_p, fo_p, k_p = p['na_p'], p['nm_p'], p['fo_p'], p['k_p']
    alpha = float(cfg['GAT_Leakyrelu_alpha'])

    def row_spec(cols):
        return pl.BlockSpec((tm, cols), lambda i: (i, 0))

    def full_spec(rows, cols):
        return pl.BlockSpec((rows, cols), lambda i: (0, 0))

    cost = pl.CostEstimate(
        flops=int(2 * Np * (k_p * 4 * fo_p + fo_p * fo_p)),
        transcendentals=int(5 * Np * fo_p),
        bytes_accessed=int(2 * Np * (na_p + nm_p + fo_p)       # bf16 x, e, hidden in
                           + 4 * Np * fo_p                     # f32 cell in
                           + 2 * (k_p * 4 * fo_p + fo_p * fo_p) + 4 * 8 * fo_p
                           + 4 * Np * fo_p * 2 + 2 * Np * fo_p))  # out,cn f32; hn bf16

    out, cn, hn = pl.pallas_call(
        partial(_gat_lstm_kernel, alpha=alpha, fout=fo_p),
        out_shape=(jax.ShapeDtypeStruct((Np, fo_p), jnp.float32),
                   jax.ShapeDtypeStruct((Np, fo_p), jnp.float32),
                   jax.ShapeDtypeStruct((Np, fo_p), jnp.bfloat16)),
        grid=(Np // tm,),
        in_specs=[row_spec(na_p),                 # X
                  row_spec(fo_p),                 # hidden (bf16 state)
                  row_spec(nm_p),                 # E
                  row_spec(fo_p),                 # cell (f32 state)
                  full_spec(k_p, 4 * fo_p),       # stacked gate weights
                  full_spec(fo_p, fo_p),          # output W
                  full_spec(8, fo_p)],            # output b (f32)
        out_specs=(row_spec(fo_p), row_spec(fo_p), row_spec(fo_p)),
        input_output_aliases={3: 1},              # cell input -> cell_new output
        compiler_params=pltpu.CompilerParams(
            dimension_semantics=("parallel",)),
        cost_estimate=cost,
    )(xp, hp, ep, cp, p['w'], p['wo'], p['b'])
    return out, cn, hn


# ----------------------------------------------------------------------------
# Module-contract forward: GAT.forward(X, E, feedback) -> (out, [cell, hidden])
# ----------------------------------------------------------------------------

def gat_apply(p, cfg, X, E, feedback):
    cell, hidden = feedback
    n_actor = cfg['n_actor']
    N = X.shape[0]
    tm, Np = _tiling(N)

    xp = _pad(X, Np, p['na_p'], jnp.bfloat16)
    ep = _pad(E, Np, p['nm_p'], jnp.bfloat16)
    cp = _pad(cell, Np, p['fo_p'], jnp.float32)
    hp = _pad(hidden, Np, p['fo_p'], jnp.bfloat16)

    out, cn, hn = gat_step_padded(p, cfg, xp, ep, cp, hp, tm)
    return (out[:N, :n_actor],
            [cn[:N, :n_actor], hn[:N, :n_actor].astype(jnp.float32)])


# ----------------------------------------------------------------------------
# main
# ----------------------------------------------------------------------------

if __name__ == "__main__":
    cfg = dict(n_actor=128, n_map=128, GAT_dropout=0.0,
               GAT_Leakyrelu_alpha=0.2, training=False)

    key = jax.random.PRNGKey(0)
    kp, kx, ke, kc, kh = jax.random.split(key, 5)

    params = gat_p(kp, cfg)

    N = 10  # small number of agent nodes
    X = jax.random.normal(kx, (N, cfg['n_actor']), jnp.float32)
    E = jax.random.normal(ke, (N, cfg['n_map']), jnp.float32)
    cell0 = jax.random.normal(kc, (N, cfg['n_actor']), jnp.float32)
    hidden0 = jax.random.normal(kh, (N, cfg['n_actor']), jnp.float32)

    # --- module-contract single step (pad -> kernel -> slice) ---------------
    run = jax.jit(lambda x, e, c, h: gat_apply(params, cfg, x, e, (c, h)))
    out1, fb1 = run(X, E, cell0, hidden0)

    # --- recurrent fast path: state stays padded across timesteps -----------
    tm, Np = _tiling(N)
    step = jax.jit(lambda xp, ep, cp, hp:
                   gat_step_padded(params, cfg, xp, ep, cp, hp, tm))

    xp = _pad(X, Np, params['na_p'], jnp.bfloat16)
    ep = _pad(E, Np, params['nm_p'], jnp.bfloat16)
    cp = _pad(cell0, Np, params['fo_p'], jnp.float32)
    hp = _pad(hidden0, Np, params['fo_p'], jnp.bfloat16)

    for _ in range(2):                       # two chained timesteps
        out_p, cp, hp = step(xp, ep, cp, hp)

    out2 = out_p[:N, :cfg['n_actor']]
    cn2 = cp[:N, :cfg['n_actor']]
    hn2 = hp[:N, :cfg['n_actor']].astype(jnp.float32)

    jax.block_until_ready((out1, fb1, out2, cn2, hn2))
    assert out1.shape == (N, cfg['n_actor'])
    assert out2.shape == (N, cfg['n_actor'])
    assert cn2.shape == (N, cfg['n_actor']) and hn2.shape == (N, cfg['n_actor'])
    assert bool(jnp.all(jnp.isfinite(out2)))
    print("KERNEL_OK")
</pallas_src>

<mosaic_0001>
module attributes {stable_mosaic.version = 11 : i64} {
  func.func @_gat_lstm_kernel(%arg0: i32, %arg1: memref<16x128xbf16, #tpu.memory_space<vmem>>, %arg2: memref<16x128xbf16, #tpu.memory_space<vmem>>, %arg3: memref<16x128xbf16, #tpu.memory_space<vmem>>, %arg4: memref<16x128xf32, #tpu.memory_space<vmem>>, %arg5: memref<384x512xbf16, #tpu.memory_space<vmem>>, %arg6: memref<128x128xbf16, #tpu.memory_space<vmem>>, %arg7: memref<8x128xf32, #tpu.memory_space<vmem>>, %arg8: memref<16x128xf32, #tpu.memory_space<vmem>>, %arg9: memref<16x128xf32, #tpu.memory_space<vmem>>, %arg10: memref<16x128xbf16, #tpu.memory_space<vmem>>) attributes {dimension_semantics = [#tpu.dimension_semantics<parallel>], iteration_bounds = array<i64: 1>, scalar_prefetch = 0 : i64, scratch_operands = 0 : i64, tpu.core_type = #tpu.core_type<tc>, window_params = [{transform_indices = @transform_0, window_bounds = array<i64: 16, 128>}, {transform_indices = @transform_1, window_bounds = array<i64: 16, 128>}, {transform_indices = @transform_2, window_bounds = array<i64: 16, 128>}, {transform_indices = @transform_3, window_bounds = array<i64: 16, 128>}, {pipeline_mode = #tpu.pipeline_mode<synchronous>, transform_indices = @transform_4, window_bounds = array<i64: 384, 512>}, {pipeline_mode = #tpu.pipeline_mode<synchronous>, transform_indices = @transform_5, window_bounds = array<i64: 128, 128>}, {pipeline_mode = #tpu.pipeline_mode<synchronous>, transform_indices = @transform_6, window_bounds = array<i64: 8, 128>}, {transform_indices = @transform_7, window_bounds = array<i64: 16, 128>}, {transform_indices = @transform_8, window_bounds = array<i64: 16, 128>}, {transform_indices = @transform_9, window_bounds = array<i64: 16, 128>}]} {
    %c0 = arith.constant 0 : index
    %c0_0 = arith.constant 0 : index
    %0 = vector.load %arg1[%c0, %c0_0] : memref<16x128xbf16, #tpu.memory_space<vmem>>, vector<16x128xbf16>
    %c0_1 = arith.constant 0 : index
    %c0_2 = arith.constant 0 : index
    %1 = vector.load %arg2[%c0_1, %c0_2] : memref<16x128xbf16, #tpu.memory_space<vmem>>, vector<16x128xbf16>
    %c0_3 = arith.constant 0 : index
    %c0_4 = arith.constant 0 : index
    %2 = vector.load %arg3[%c0_3, %c0_4] : memref<16x128xbf16, #tpu.memory_space<vmem>>, vector<16x128xbf16>
    %3 = tpu.concatenate %0, %1, %2 in 1 : vector<16x128xbf16>, vector<16x128xbf16>, vector<16x128xbf16> -> vector<16x384xbf16>
    %c0_5 = arith.constant 0 : index
    %c0_6 = arith.constant 0 : index
    %4 = vector.load %arg5[%c0_5, %c0_6] : memref<384x512xbf16, #tpu.memory_space<vmem>>, vector<384x512xbf16>
    %cst = arith.constant dense<0.000000e+00> : vector<16x512xf32>
    %5 = tpu.matmul %3, %4, %cst {dimension_numbers = #tpu.dot_dimension_numbers<[1], [0], [0], [1], [0, 0, 1, 1], [], []>} : vector<16x384xbf16>, vector<384x512xbf16>, vector<16x512xf32> -> vector<16x512xf32>
    %cst_7 = arith.constant 2.000000e-01 : f32
    %6 = vector.broadcast %cst_7 : f32 to vector<16x512xf32>
    %7 = arith.mulf %6, %5 : vector<16x512xf32>
    %8 = arith.maximumf %5, %7 : vector<16x512xf32>
    %9 = vector.extract_strided_slice %8 {offsets = [0, 0], sizes = [16, 128], strides = [1, 1]} : vector<16x512xf32> to vector<16x128xf32>
    %10 = arith.negf %9 : vector<16x128xf32>
    %11 = math.exp %10 : vector<16x128xf32>
    %cst_8 = arith.constant 1.000000e+00 : f32
    %12 = vector.broadcast %cst_8 : f32 to vector<16x128xf32>
    %13 = arith.addf %12, %11 : vector<16x128xf32>
    %14 = arith.divf %12, %13 : vector<16x128xf32>
    %15 = vector.extract_strided_slice %8 {offsets = [0, 128], sizes = [16, 128], strides = [1, 1]} : vector<16x512xf32> to vector<16x128xf32>
    %16 = arith.negf %15 : vector<16x128xf32>
    %17 = math.exp %16 : vector<16x128xf32>
    %cst_9 = arith.constant 1.000000e+00 : f32
    %18 = vector.broadcast %cst_9 : f32 to vector<16x128xf32>
    %19 = arith.addf %18, %17 : vector<16x128xf32>
    %20 = arith.divf %18, %19 : vector<16x128xf32>
    %21 = vector.extract_strided_slice %8 {offsets = [0, 256], sizes = [16, 128], strides = [1, 1]} : vector<16x512xf32> to vector<16x128xf32>
    %22 = math.tanh %21 : vector<16x128xf32>
    %23 = vector.extract_strided_slice %8 {offsets = [0, 384], sizes = [16, 128], strides = [1, 1]} : vector<16x512xf32> to vector<16x128xf32>
    %24 = arith.negf %23 : vector<16x128xf32>
    %25 = math.exp %24 : vector<16x128xf32>
    %cst_10 = arith.constant 1.000000e+00 : f32
    %26 = vector.broadcast %cst_10 : f32 to vector<16x128xf32>
    %27 = arith.addf %26, %25 : vector<16x128xf32>
    %28 = arith.divf %26, %27 : vector<16x128xf32>
    %c0_11 = arith.constant 0 : index
    %c0_12 = arith.constant 0 : index
    %29 = vector.load %arg4[%c0_11, %c0_12] : memref<16x128xf32, #tpu.memory_space<vmem>>, vector<16x128xf32>
    %30 = arith.mulf %29, %14 : vector<16x128xf32>
    %31 = arith.mulf %20, %22 : vector<16x128xf32>
    %32 = arith.addf %30, %31 : vector<16x128xf32>
    %33 = math.tanh %32 : vector<16x128xf32>
    %34 = arith.mulf %33, %28 : vector<16x128xf32>
    %c0_13 = arith.constant 0 : index
    %c0_14 = arith.constant 0 : index
    %35 = vector.load %arg9[%c0_13, %c0_14] : memref<16x128xf32, #tpu.memory_space<vmem>>, vector<16x128xf32>
    tpu.vector_store %arg9[%c0_13, %c0_14], %32 {strides = array<i32>} : memref<16x128xf32, #tpu.memory_space<vmem>>, vector<16x128xf32>,
    %36 = arith.truncf %34 : vector<16x128xf32> to vector<16x128xbf16>
    %c0_15 = arith.constant 0 : index
    %c0_16 = arith.constant 0 : index
    %37 = vector.load %arg10[%c0_15, %c0_16] : memref<16x128xbf16, #tpu.memory_space<vmem>>, vector<16x128xbf16>
    tpu.vector_store %arg10[%c0_15, %c0_16], %36 {strides = array<i32>} : memref<16x128xbf16, #tpu.memory_space<vmem>>, vector<16x128xbf16>,
    %c0_17 = arith.constant 0 : index
    %c0_18 = arith.constant 0 : index
    %38 = vector.load %arg6[%c0_17, %c0_18] : memref<128x128xbf16, #tpu.memory_space<vmem>>, vector<128x128xbf16>
    %cst_19 = arith.constant dense<0.000000e+00> : vector<16x128xf32>
    %39 = tpu.matmul %36, %38, %cst_19 {dimension_numbers = #tpu.dot_dimension_numbers<[1], [0], [0], [1], [0, 0, 1, 1], [], []>} : vector<16x128xbf16>, vector<128x128xbf16>, vector<16x128xf32> -> vector<16x128xf32>
    %c0_20 = arith.constant 0 : index
    %c0_21 = arith.constant 0 : index
    %40 = vector.load %arg7[%c0_20, %c0_21] : memref<8x128xf32, #tpu.memory_space<vmem>>, vector<1x128xf32>
    %41 = vector.broadcast %40 : vector<1x128xf32> to vector<16x128xf32>
    %42 = arith.addf %39, %41 : vector<16x128xf32>
    %c0_22 = arith.constant 0 : index
    %c0_23 = arith.constant 0 : index
    %43 = vector.load %arg8[%c0_22, %c0_23] : memref<16x128xf32, #tpu.memory_space<vmem>>, vector<16x128xf32>
    tpu.vector_store %arg8[%c0_22, %c0_23], %42 {strides = array<i32>} : memref<16x128xf32, #tpu.memory_space<vmem>>, vector<16x128xf32>,
    return
  }
  func.func @transform_0(%arg0: i32) -> (i32, i32) {
    %c0_i32 = arith.constant 0 : i32
    %c0_i32_0 = arith.constant 0 : i32
    return %arg0, %c0_i32 : i32, i32
  }
  func.func @transform_1(%arg0: i32) -> (i32, i32) {
    %c0_i32 = arith.constant 0 : i32
    %c0_i32_0 = arith.constant 0 : i32
    return %arg0, %c0_i32 : i32, i32
  }
  func.func @transform_2(%arg0: i32) -> (i32, i32) {
    %c0_i32 = arith.constant 0 : i32
    %c0_i32_0 = arith.constant 0 : i32
    return %arg0, %c0_i32 : i32, i32
  }
  func.func @transform_3(%arg0: i32) -> (i32, i32) {
    %c0_i32 = arith.constant 0 : i32
    %c0_i32_0 = arith.constant 0 : i32
    return %arg0, %c0_i32 : i32, i32
  }
  func.func @transform_4(%arg0: i32) -> (i32, i32) {
    %c0_i32 = arith.constant 0 : i32
    %c0_i32_0 = arith.constant 0 : i32
    %c0_i32_1 = arith.constant 0 : i32
    return %c0_i32, %c0_i32_0 : i32, i32
  }
  func.func @transform_5(%arg0: i32) -> (i32, i32) {
    %c0_i32 = arith.constant 0 : i32
    %c0_i32_0 = arith.constant 0 : i32
    %c0_i32_1 = arith.constant 0 : i32
    return %c0_i32, %c0_i32_0 : i32, i32
  }
  func.func @transform_6(%arg0: i32) -> (i32, i32) {
    %c0_i32 = arith.constant 0 : i32
    %c0_i32_0 = arith.constant 0 : i32
    %c0_i32_1 = arith.constant 0 : i32
    return %c0_i32, %c0_i32_0 : i32, i32
  }
  func.func @transform_7(%arg0: i32) -> (i32, i32) {
    %c0_i32 = arith.constant 0 : i32
    %c0_i32_0 = arith.constant 0 : i32
    return %arg0, %c0_i32 : i32, i32
  }
  func.func @transform_8(%arg0: i32) -> (i32, i32) {
    %c0_i32 = arith.constant 0 : i32
    %c0_i32_0 = arith.constant 0 : i32
    return %arg0, %c0_i32 : i32, i32
  }
  func.func @transform_9(%arg0: i32) -> (i32, i32) {
    %c0_i32 = arith.constant 0 : i32
    %c0_i32_0 = arith.constant 0 : i32
    return %arg0, %c0_i32 : i32, i32
  }
}

</mosaic_0001>

<llo_original>
// kernel: _lambda_.1
$region0: #{_lambda_.1}
  #allocation0 [shape = 'u32[]', space=smem, size = 0x4, offset = 0x4, fixed_abs, tag = 'smem constant byte address 0x4 - core index']
  #allocation1 [shape = 'u32[72,128]{1,0:T(1,128)}', space=vmem, size = 0x9000, scoped, tag = 'internal scratch']
  %s0 = inlined_call_operand.vmem [shape: bf16[16,128], index: 0, kind: input, shape index: {}]
  %s1 = inlined_call_operand.vmem [shape: bf16[16,128], index: 1, kind: input, shape index: {}]
  %s2 = inlined_call_operand.vmem [shape: bf16[16,128], index: 2, kind: input, shape index: {}]
  %s3 = inlined_call_operand.vmem [shape: f32[16,128], index: 3, kind: input, shape index: {}, may-alias: {3,8}]
  %s4 = inlined_call_operand.hbm [shape: bf16[384,512], index: 4, kind: input, shape index: {}]
  %s5 = inlined_call_operand.vmem [shape: bf16[128,128], index: 5, kind: input, shape index: {}]
  %s6 = inlined_call_operand.vmem [shape: f32[8,128], index: 6, kind: input, shape index: {}]
  %s7 = inlined_call_operand.hbm [shape: f32[16,128], index: 7, kind: output, shape index: {0}]
  %s8 = inlined_call_operand.vmem [shape: f32[16,128], index: 8, kind: output, shape index: {1}, may-alias: {3,8}]
  %s9 = inlined_call_operand.vmem [shape: bf16[16,128], index: 9, kind: output, shape index: {2}]
  %10 = xla_tuple %s7, %s8, %s9
  %s11 = sld [smem:[#allocation0]]
  $region58: #{_lambda_.1} parent=0
    _
  %s13 = ssub.s32 1, %s11
  %s14 = scalar_select 0, %s13, %s11
  $region1: #{_lambda_.1} parent=0
    #allocation2 [shape = 'u8[393216]{0}', space=vmem, size = 0x60000, scoped, tag = 'input window, operand 4, single buffered']
    #allocation3 [shape = 's32[1]{0}', space=sflag, size = 0x4, scoped, tag = 'scoped memory for _lambda_.1']
    #allocation4 [shape = 's32[1]{0}', space=sflag, size = 0x4, scoped, tag = 'scoped memory for _lambda_.1']
    #allocation5 [shape = 'u8[8192]{0}', space=vmem, size = 0x2000, scoped, tag = 'output window, operand 0, single buffered']
    %15 = vsyncpa [#allocation3], 0
    %16 = vsyncpa [#allocation4], 0
    // Predicated region
    $region2: #{_lambda_.1} parent=1 // pred_check
      _
    $region3: #{_lambda_.1} parent=1 // pred_check_branch
      %18 = sbr.rel (0) target = $region5
    $region4: #{_lambda_.1} parent=1 // pred_region
      _
    $region5: #{_lambda_.1} parent=1 // pred_fallthru
      _
    // Predicated region
    $region6: #{_lambda_.1} parent=1 // pred_check
      _
    $region7: #{_lambda_.1} parent=1 // pred_check_branch
      %20 = sbr.rel (0) target = $region9
    $region8: #{_lambda_.1} parent=1 // pred_region
      _
    $region9: #{_lambda_.1} parent=1 // pred_fallthru
      _
    // Predicated region
    $region10: #{_lambda_.1} parent=1 // pred_check
      _
    $region11: #{_lambda_.1} parent=1 // pred_check_branch
      %22 = sbr.rel (0) target = $region13
    $region12: #{_lambda_.1} parent=1 // pred_region
      _
    $region13: #{_lambda_.1} parent=1 // pred_fallthru
      _
    // Predicated region
    $region14: #{_lambda_.1} parent=1 // pred_check
      _
    $region15: #{_lambda_.1} parent=1 // pred_check_branch
      %24 = sbr.rel (0) target = $region17
    $region16: #{_lambda_.1} parent=1 // pred_region
      _
    $region17: #{_lambda_.1} parent=1 // pred_fallthru
      _
    // Predicated region
    $region18: #{_lambda_.1} parent=1 // pred_check
      _
    $region19: #{_lambda_.1} parent=1 // pred_check_branch
      %26 = sbr.rel (0) target = $region21
    $region20: #{_lambda_.1} parent=1 // pred_region
      %28 = vsyncadd [#allocation3], 0
      %s29 = sshll.u32 %s4, 4
      %s30 = int_to_ptr.hbm [resolvable:$true] %s29
      %s31 = sshll.u32 [#allocation2], 4
      %s32 = int_to_ptr.vmem [resolvable:$true] %s31
      %37 = dma.hbm_to_vmem [thread:$0]  %s30, 12288, %s32, [#allocation3], 256, 256, 16
    $region21: #{_lambda_.1} parent=1 // pred_fallthru
      _
    // Predicated region
    $region22: #{_lambda_.1} parent=1 // pred_check
      _
    $region23: #{_lambda_.1} parent=1 // pred_check_branch
      %39 = sbr.rel (0) target = $region25
    $region24: #{_lambda_.1} parent=1 // pred_region
      _
    $region25: #{_lambda_.1} parent=1 // pred_fallthru
      _
    // Predicated region
    $region26: #{_lambda_.1} parent=1 // pred_check
      _
    $region27: #{_lambda_.1} parent=1 // pred_check_branch
      %41 = sbr.rel (0) target = $region29
    $region28: #{_lambda_.1} parent=1 // pred_region
      _
    $region29: #{_lambda_.1} parent=1 // pred_fallthru
      _
    // Predicated region
    $region30: #{_lambda_.1} parent=1 // pred_check
      _
    $region31: #{_lambda_.1} parent=1 // pred_check_branch
      %43 = sbr.rel (0) target = $region33
    $region32: #{_lambda_.1} parent=1 // pred_region
      %45 = dma.done [#allocation3], 12288
    $region33: #{_lambda_.1} parent=1 // pred_fallthru
      _
    %v46 = vld [vmem:[%s0] sm:$0xf]
    %v47 = vld [vmem:[%s0 + $0x4] sm:$0xf]
    %v48 = vld [vmem:[%s1] sm:$0xf]
    %v49 = vld [vmem:[%s1 + $0x4] sm:$0xf]
    %v50 = vld [vmem:[%s2] sm:$0xf]
    %v51 = vld [vmem:[%s2 + $0x4] sm:$0xf]
    %v54 = vunpack.c.l.b16 %v46
    %v55 = vunpack.c.l.b16 %v47
    %v56 = vpack.c.b16 %v55, %v54
    %v60 = vunpack.c.l.b16 %v48
    %v61 = vunpack.c.l.b16 %v49
    %v62 = vpack.c.b16 %v61, %v60
    %v66 = vunpack.c.l.b16 %v50
    %v67 = vunpack.c.l.b16 %v51
    %v68 = vpack.c.b16 %v67, %v66
    %v70 = vld [vmem:[#allocation2] sm:$0xff]
    %v71 = vld [vmem:[#allocation2 + $0x8] sm:$0xff]
    %v72 = vld [vmem:[#allocation2 + $0x10] sm:$0xff]
    %v73 = vld [vmem:[#allocation2 + $0x18] sm:$0xff]
    %v74 = vld [vmem:[#allocation2 + $0x20] sm:$0xff]
    %v75 = vld [vmem:[#allocation2 + $0x28] sm:$0xff]
    %v76 = vld [vmem:[#allocation2 + $0x30] sm:$0xff]
    %v77 = vld [vmem:[#allocation2 + $0x38] sm:$0xff]
    %v78 = vld [vmem:[#allocation2 + $0x40] sm:$0xff]
    %v79 = vld [vmem:[#allocation2 + $0x48] sm:$0xff]
    %v80 = vld [vmem:[#allocation2 + $0x50] sm:$0xff]
    %v81 = vld [vmem:[#allocation2 + $0x58] sm:$0xff]
    %v82 = vld [vmem:[#allocation2 + $0x60] sm:$0xff]
    %v83 = vld [vmem:[#allocation2 + $0x68] sm:$0xff]
    %v84 = vld [vmem:[#allocation2 + $0x70] sm:$0xff]
    %v85 = vld [vmem:[#allocation2 + $0x78] sm:$0xff]
    %v86 = vld [vmem:[#allocation2 + $0x80] sm:$0xff]
    %v87 = vld [vmem:[#allocation2 + $0x88] sm:$0xff]
    %v88 = vld [vmem:[#allocation2 + $0x90] sm:$0xff]
    %v89 = vld [vmem:[#allocation2 + $0x98] sm:$0xff]
    %v90 = vld [vmem:[#allocation2 + $0xa0] sm:$0xff]
    %v91 = vld [vmem:[#allocation2 + $0xa8] sm:$0xff]
    %v92 = vld [vmem:[#allocation2 + $0xb0] sm:$0xff]
    %v93 = vld [vmem:[#allocation2 + $0xb8] sm:$0xff]
    %v94 = vld [vmem:[#allocation2 + $0xc0] sm:$0xff]
    %v95 = vld [vmem:[#allocation2 + $0xc8] sm:$0xff]
    %v96 = vld [vmem:[#allocation2 + $0xd0] sm:$0xff]
    %v97 = vld [vmem:[#allocation2 + $0xd8] sm:$0xff]
    %v98 = vld [vmem:[#allocation2 + $0xe0] sm:$0xff]
    %v99 = vld [vmem:[#allocation2 + $0xe8] sm:$0xff]
    %v100 = vld [vmem:[#allocation2 + $0xf0] sm:$0xff]
    %v101 = vld [vmem:[#allocation2 + $0xf8] sm:$0xff]
    %v102 = vld [vmem:[#allocation2 + $0x100] sm:$0xff]
    %v103 = vld [vmem:[#allocation2 + $0x108] sm:$0xff]
    %v104 = vld [vmem:[#allocation2 + $0x110] sm:$0xff]
    %v105 = vld [vmem:[#allocation2 + $0x118] sm:$0xff]
    %v106 = vld [vmem:[#allocation2 + $0x120] sm:$0xff]
    %v107 = vld [vmem:[#allocation2 + $0x128] sm:$0xff]
    %v108 = vld [vmem:[#allocation2 + $0x130] sm:$0xff]
    %v109 = vld [vmem:[#allocation2 + $0x138] sm:$0xff]
    %v110 = vld [vmem:[#allocation2 + $0x140] sm:$0xff]
    %v111 = vld [vmem:[#allocation2 + $0x148] sm:$0xff]
    %v112 = vld [vmem:[#allocation2 + $0x150] sm:$0xff]
    %v113 = vld [vmem:[#allocation2 + $0x158] sm:$0xff]
    %v114 = vld [vmem:[#allocation2 + $0x160] sm:$0xff]
    %v115 = vld [vmem:[#allocation2 + $0x168] sm:$0xff]
    %v116 = vld [vmem:[#allocation2 + $0x170] sm:$0xff]
    %v117 = vld [vmem:[#allocation2 + $0x178] sm:$0xff]
    %v118 = vld [vmem:[#allocation2 + $0x180] sm:$0xff]
    %v119 = vld [vmem:[#allocation2 + $0x188] sm:$0xff]
    %v120 = vld [vmem:[#allocation2 + $0x190] sm:$0xff]
    %v121 = vld [vmem:[#allocation2 + $0x198] sm:$0xff]
    %v122 = vld [vmem:[#allocation2 + $0x1a0] sm:$0xff]
    %v123 = vld [vmem:[#allocation2 + $0x1a8] sm:$0xff]
    %v124 = vld [vmem:[#allocation2 + $0x1b0] sm:$0xff]
    %v125 = vld [vmem:[#allocation2 + $0x1b8] sm:$0xff]
    %v126 = vld [vmem:[#allocation2 + $0x1c0] sm:$0xff]
    %v127 = vld [vmem:[#allocation2 + $0x1c8] sm:$0xff]
    %v128 = vld [vmem:[#allocation2 + $0x1d0] sm:$0xff]
    %v129 = vld [vmem:[#allocation2 + $0x1d8] sm:$0xff]
    %v130 = vld [vmem:[#allocation2 + $0x1e0] sm:$0xff]
    %v131 = vld [vmem:[#allocation2 + $0x1e8] sm:$0xff]
    %v132 = vld [vmem:[#allocation2 + $0x1f0] sm:$0xff]
    %v133 = vld [vmem:[#allocation2 + $0x1f8] sm:$0xff]
    %v134 = vld [vmem:[#allocation2 + $0x200] sm:$0xff]
    %v135 = vld [vmem:[#allocation2 + $0x208] sm:$0xff]
    %v136 = vld [vmem:[#allocation2 + $0x210] sm:$0xff]
    %v137 = vld [vmem:[#allocation2 + $0x218] sm:$0xff]
    %v138 = vld [vmem:[#allocation2 + $0x220] sm:$0xff]
    %v139 = vld [vmem:[#allocation2 + $0x228] sm:$0xff]
    %v140 = vld [vmem:[#allocation2 + $0x230] sm:$0xff]
    %v141 = vld [vmem:[#allocation2 + $0x238] sm:$0xff]
    %v142 = vld [vmem:[#allocation2 + $0x240] sm:$0xff]
    %v143 = vld [vmem:[#allocation2 + $0x248] sm:$0xff]
    %v144 = vld [vmem:[#allocation2 + $0x250] sm:$0xff]
    %v145 = vld [vmem:[#allocation2 + $0x258] sm:$0xff]
    %v146 = vld [vmem:[#allocation2 + $0x260] sm:$0xff]
    %v147 = vld [vmem:[#allocation2 + $0x268] sm:$0xff]
    %v148 = vld [vmem:[#allocation2 + $0x270] sm:$0xff]
    %v149 = vld [vmem:[#allocation2 + $0x278] sm:$0xff]
    %v150 = vld [vmem:[#allocation2 + $0x280] sm:$0xff]
    %v151 = vld [vmem:[#allocation2 + $0x288] sm:$0xff]
    %v152 = vld [vmem:[#allocation2 + $0x290] sm:$0xff]
    %v153 = vld [vmem:[#allocation2 + $0x298] sm:$0xff]
    %v154 = vld [vmem:[#allocation2 + $0x2a0] sm:$0xff]
    %v155 = vld [vmem:[#allocation2 + $0x2a8] sm:$0xff]
    %v156 = vld [vmem:[#allocation2 + $0x2b0] sm:$0xff]
    %v157 = vld [vmem:[#allocation2 + $0x2b8] sm:$0xff]
    %v158 = vld [vmem:[#allocation2 + $0x2c0] sm:$0xff]
    %v159 = vld [vmem:[#allocation2 + $0x2c8] sm:$0xff]
    %v160 = vld [vmem:[#allocation2 + $0x2d0] sm:$0xff]
    %v161 = vld [vmem:[#allocation2 + $0x2d8] sm:$0xff]
    %v162 = vld [vmem:[#allocation2 + $0x2e0] sm:$0xff]
    %v163 = vld [vmem:[#allocation2 + $0x2e8] sm:$0xff]
    %v164 = vld [vmem:[#allocation2 + $0x2f0] sm:$0xff]
    %v165 = vld [vmem:[#allocation2 + $0x2f8] sm:$0xff]
    %v262 = vunpack.c.l.b16 %v70
    %v263 = vunpack.c.h.b16 %v70
    %v264 = vunpack.c.l.b16 %v71
    %v265 = vunpack.c.h.b16 %v71
    %v266 = vunpack.c.l.b16 %v72
    %v267 = vunpack.c.h.b16 %v72
    %v268 = vunpack.c.l.b16 %v73
    %v269 = vunpack.c.h.b16 %v73
    %v270 = vunpack.c.l.b16 %v74
    %v271 = vunpack.c.h.b16 %v74
    %v272 = vunpack.c.l.b16 %v75
    %v273 = vunpack.c.h.b16 %v75
    %v274 = vunpack.c.l.b16 %v76
    %v275 = vunpack.c.h.b16 %v76
    %v276 = vunpack.c.l.b16 %v77
    %v277 = vunpack.c.h.b16 %v77
    %v278 = vunpack.c.l.b16 %v78
    %v279 = vunpack.c.h.b16 %v78
    %v280 = vunpack.c.l.b16 %v79
    %v281 = vunpack.c.h.b16 %v79
    %v282 = vunpack.c.l.b16 %v80
    %v283 = vunpack.c.h.b16 %v80
    %v284 = vunpack.c.l.b16 %v81
    %v285 = vunpack.c.h.b16 %v81
    %v286 = vunpack.c.l.b16 %v82
    %v287 = vunpack.c.h.b16 %v82
    %v288 = vunpack.c.l.b16 %v83
    %v289 = vunpack.c.h.b16 %v83
    %v290 = vunpack.c.l.b16 %v84
    %v291 = vunpack.c.h.b16 %v84
    %v292 = vunpack.c.l.b16 %v85
    %v293 = vunpack.c.h.b16 %v85
    %v294 = vunpack.c.l.b16 %v86
    %v295 = vunpack.c.h.b16 %v86
    %v296 = vunpack.c.l.b16 %v87
    %v297 = vunpack.c.h.b16 %v87
    %v298 = vunpack.c.l.b16 %v88
    %v299 = vunpack.c.h.b16 %v88
    %v300 = vunpack.c.l.b16 %v89
    %v301 = vunpack.c.h.b16 %v89
    %v302 = vunpack.c.l.b16 %v90
    %v303 = vunpack.c.h.b16 %v90
    %v304 = vunpack.c.l.b16 %v91
    %v305 = vunpack.c.h.b16 %v91
    %v306 = vunpack.c.l.b16 %v92
    %v307 = vunpack.c.h.b16 %v92
    %v308 = vunpack.c.l.b16 %v93
    %v309 = vunpack.c.h.b16 %v93
    %v310 = vunpack.c.l.b16 %v94
    %v311 = vunpack.c.h.b16 %v94
    %v312 = vunpack.c.l.b16 %v95
    %v313 = vunpack.c.h.b16 %v95
    %v314 = vunpack.c.l.b16 %v96
    %v315 = vunpack.c.h.b16 %v96
    %v316 = vunpack.c.l.b16 %v97
    %v317 = vunpack.c.h.b16 %v97
    %v318 = vunpack.c.l.b16 %v98
    %v319 = vunpack.c.h.b16 %v98
    %v320 = vunpack.c.l.b16 %v99
    %v321 = vunpack.c.h.b16 %v99
    %v322 = vunpack.c.l.b16 %v100
    %v323 = vunpack.c.h.b16 %v100
    %v324 = vunpack.c.l.b16 %v101
    %v325 = vunpack.c.h.b16 %v101
    %v326 = vunpack.c.l.b16 %v102
    %v327 = vunpack.c.h.b16 %v102
    %v328 = vunpack.c.l.b16 %v103
    %v329 = vunpack.c.h.b16 %v103
    %v330 = vunpack.c.l.b16 %v104
    %v331 = vunpack.c.h.b16 %v104
    %v332 = vunpack.c.l.b16 %v105
    %v333 = vunpack.c.h.b16 %v105
    %v334 = vunpack.c.l.b16 %v106
    %v335 = vunpack.c.h.b16 %v106
    %v336 = vunpack.c.l.b16 %v107
    %v337 = vunpack.c.h.b16 %v107
    %v338 = vunpack.c.l.b16 %v108
    %v339 = vunpack.c.h.b16 %v108
    %v340 = vunpack.c.l.b16 %v109
    %v341 = vunpack.c.h.b16 %v109
    %v342 = vunpack.c.l.b16 %v110
    %v343 = vunpack.c.h.b16 %v110
    %v344 = vunpack.c.l.b16 %v111
    %v345 = vunpack.c.h.b16 %v111
    %v346 = vunpack.c.l.b16 %v112
    %v347 = vunpack.c.h.b16 %v112
    %v348 = vunpack.c.l.b16 %v113
    %v349 = vunpack.c.h.b16 %v113
    %v350 = vunpack.c.l.b16 %v114
    %v351 = vunpack.c.h.b16 %v114
    %v352 = vunpack.c.l.b16 %v115
    %v353 = vunpack.c.h.b16 %v115
    %v354 = vunpack.c.l.b16 %v116
    %v355 = vunpack.c.h.b16 %v116
    %v356 = vunpack.c.l.b16 %v117
    %v357 = vunpack.c.h.b16 %v117
    %v358 = vunpack.c.l.b16 %v118
    %v359 = vunpack.c.h.b16 %v118
    %v360 = vunpack.c.l.b16 %v119
    %v361 = vunpack.c.h.b16 %v119
    %v362 = vunpack.c.l.b16 %v120
    %v363 = vunpack.c.h.b16 %v120
    %v364 = vunpack.c.l.b16 %v121
    %v365 = vunpack.c.h.b16 %v121
    %v366 = vunpack.c.l.b16 %v122
    %v367 = vunpack.c.h.b16 %v122
    %v368 = vunpack.c.l.b16 %v123
    %v369 = vunpack.c.h.b16 %v123
    %v370 = vunpack.c.l.b16 %v124
    %v371 = vunpack.c.h.b16 %v124
    %v372 = vunpack.c.l.b16 %v125
    %v373 = vunpack.c.h.b16 %v125
    %v374 = vunpack.c.l.b16 %v126
    %v375 = vunpack.c.h.b16 %v126
    %v376 = vunpack.c.l.b16 %v127
    %v377 = vunpack.c.h.b16 %v127
    %v378 = vunpack.c.l.b16 %v128
    %v379 = vunpack.c.h.b16 %v128
    %v380 = vunpack.c.l.b16 %v129
    %v381 = vunpack.c.h.b16 %v129
    %v382 = vunpack.c.l.b16 %v130
    %v383 = vunpack.c.h.b16 %v130
    %v384 = vunpack.c.l.b16 %v131
    %v385 = vunpack.c.h.b16 %v131
    %v386 = vunpack.c.l.b16 %v132
    %v387 = vunpack.c.h.b16 %v132
    %v388 = vunpack.c.l.b16 %v133
    %v389 = vunpack.c.h.b16 %v133
    %v390 = vunpack.c.l.b16 %v134
    %v391 = vunpack.c.h.b16 %v134
    %v392 = vunpack.c.l.b16 %v135
    %v393 = vunpack.c.h.b16 %v135
    %v394 = vunpack.c.l.b16 %v136
    %v395 = vunpack.c.h.b16 %v136
    %v396 = vunpack.c.l.b16 %v137
    %v397 = vunpack.c.h.b16 %v137
    %v398 = vunpack.c.l.b16 %v138
    %v399 = vunpack.c.h.b16 %v138
    %v400 = vunpack.c.l.b16 %v139
    %v401 = vunpack.c.h.b16 %v139
    %v402 = vunpack.c.l.b16 %v140
    %v403 = vunpack.c.h.b16 %v140
    %v404 = vunpack.c.l.b16 %v141
    %v405 = vunpack.c.h.b16 %v141
    %v406 = vunpack.c.l.b16 %v142
    %v407 = vunpack.c.h.b16 %v142
    %v408 = vunpack.c.l.b16 %v143
    %v409 = vunpack.c.h.b16 %v143
    %v410 = vunpack.c.l.b16 %v144
    %v411 = vunpack.c.h.b16 %v144
    %v412 = vunpack.c.l.b16 %v145
    %v413 = vunpack.c.h.b16 %v145
    %v414 = vunpack.c.l.b16 %v146
    %v415 = vunpack.c.h.b16 %v146
    %v416 = vunpack.c.l.b16 %v147
    %v417 = vunpack.c.h.b16 %v147
    %v418 = vunpack.c.l.b16 %v148
    %v419 = vunpack.c.h.b16 %v148
    %v420 = vunpack.c.l.b16 %v149
    %v421 = vunpack.c.h.b16 %v149
    %v422 = vunpack.c.l.b16 %v150
    %v423 = vunpack.c.h.b16 %v150
    %v424 = vunpack.c.l.b16 %v151
    %v425 = vunpack.c.h.b16 %v151
    %v426 = vunpack.c.l.b16 %v152
    %v427 = vunpack.c.h.b16 %v152
    %v428 = vunpack.c.l.b16 %v153
    %v429 = vunpack.c.h.b16 %v153
    %v430 = vunpack.c.l.b16 %v154
    %v431 = vunpack.c.h.b16 %v154
    %v432 = vunpack.c.l.b16 %v155
    %v433 = vunpack.c.h.b16 %v155
    %v434 = vunpack.c.l.b16 %v156
    %v435 = vunpack.c.h.b16 %v156
    %v436 = vunpack.c.l.b16 %v157
    %v437 = vunpack.c.h.b16 %v157
    %v438 = vunpack.c.l.b16 %v158
    %v439 = vunpack.c.h.b16 %v158
    %v440 = vunpack.c.l.b16 %v159
    %v441 = vunpack.c.h.b16 %v159
    %v442 = vunpack.c.l.b16 %v160
    %v443 = vunpack.c.h.b16 %v160
    %v444 = vunpack.c.l.b16 %v161
    %v445 = vunpack.c.h.b16 %v161
    %v446 = vunpack.c.l.b16 %v162
    %v447 = vunpack.c.h.b16 %v162
    %v448 = vunpack.c.l.b16 %v163
    %v449 = vunpack.c.h.b16 %v163
    %v450 = vunpack.c.l.b16 %v164
    %v451 = vunpack.c.h.b16 %v164
    %v452 = vunpack.c.l.b16 %v165
    %v453 = vunpack.c.h.b16 %v165
    %v454 = vpack.c.b16 %v266, %v262
    %v455 = vpack.c.b16 %v267, %v263
    %v456 = vpack.c.b16 %v268, %v264
    %v457 = vpack.c.b16 %v269, %v265
    %v458 = vpack.c.b16 %v274, %v270
    %v459 = vpack.c.b16 %v275, %v271
    %v460 = vpack.c.b16 %v276, %v272
    %v461 = vpack.c.b16 %v277, %v273
    %v462 = vpack.c.b16 %v282, %v278
    %v463 = vpack.c.b16 %v283, %v279
    %v464 = vpack.c.b16 %v284, %v280
    %v465 = vpack.c.b16 %v285, %v281
    %v466 = vpack.c.b16 %v290, %v286
    %v467 = vpack.c.b16 %v291, %v287
    %v468 = vpack.c.b16 %v292, %v288
    %v469 = vpack.c.b16 %v293, %v289
    %v470 = vpack.c.b16 %v298, %v294
    %v471 = vpack.c.b16 %v299, %v295
    %v472 = vpack.c.b16 %v300, %v296
    %v473 = vpack.c.b16 %v301, %v297
    %v474 = vpack.c.b16 %v306, %v302
    %v475 = vpack.c.b16 %v307, %v303
    %v476 = vpack.c.b16 %v308, %v304
    %v477 = vpack.c.b16 %v309, %v305
    %v478 = vpack.c.b16 %v314, %v310
    %v479 = vpack.c.b16 %v315, %v311
    %v480 = vpack.c.b16 %v316, %v312
    %v481 = vpack.c.b16 %v317, %v313
    %v482 = vpack.c.b16 %v322, %v318
    %v483 = vpack.c.b16 %v323, %v319
    %v484 = vpack.c.b16 %v324, %v320
    %v485 = vpack.c.b16 %v325, %v321
    %v486 = vpack.c.b16 %v330, %v326
    %v487 = vpack.c.b16 %v331, %v327
    %v488 = vpack.c.b16 %v332, %v328
    %v489 = vpack.c.b16 %v333, %v329
    %v490 = vpack.c.b16 %v338, %v334
    %v491 = vpack.c.b16 %v339, %v335
    %v492 = vpack.c.b16 %v340, %v336
    %v493 = vpack.c.b16 %v341, %v337
    %v494 = vpack.c.b16 %v346, %v342
    %v495 = vpack.c.b16 %v347, %v343
    %v496 = vpack.c.b16 %v348, %v344
    %v497 = vpack.c.b16 %v349, %v345
    %v498 = vpack.c.b16 %v354, %v350
    %v499 = vpack.c.b16 %v355, %v351
    %v500 = vpack.c.b16 %v356, %v352
    %v501 = vpack.c.b16 %v357, %v353
    %v502 = vpack.c.b16 %v362, %v358
    %v503 = vpack.c.b16 %v363, %v359
    %v504 = vpack.c.b16 %v364, %v360
    %v505 = vpack.c.b16 %v365, %v361
    %v506 = vpack.c.b16 %v370, %v366
    %v507 = vpack.c.b16 %v371, %v367
    %v508 = vpack.c.b16 %v372, %v368
    %v509 = vpack.c.b16 %v373, %v369
    %v510 = vpack.c.b16 %v378, %v374
    %v511 = vpack.c.b16 %v379, %v375
    %v512 = vpack.c.b16 %v380, %v376
    %v513 = vpack.c.b16 %v381, %v377
    %v514 = vpack.c.b16 %v386, %v382
    %v515 = vpack.c.b16 %v387, %v383
    %v516 = vpack.c.b16 %v388, %v384
    %v517 = vpack.c.b16 %v389, %v385
    %v518 = vpack.c.b16 %v394, %v390
    %v519 = vpack.c.b16 %v395, %v391
    %v520 = vpack.c.b16 %v396, %v392
    %v521 = vpack.c.b16 %v397, %v393
    %v522 = vpack.c.b16 %v402, %v398
    %v523 = vpack.c.b16 %v403, %v399
    %v524 = vpack.c.b16 %v404, %v400
    %v525 = vpack.c.b16 %v405, %v401
    %v526 = vpack.c.b16 %v410, %v406
    %v527 = vpack.c.b16 %v411, %v407
    %v528 = vpack.c.b16 %v412, %v408
    %v529 = vpack.c.b16 %v413, %v409
    %v530 = vpack.c.b16 %v418, %v414
    %v531 = vpack.c.b16 %v419, %v415
    %v532 = vpack.c.b16 %v420, %v416
    %v533 = vpack.c.b16 %v421, %v417
    %v534 = vpack.c.b16 %v426, %v422
    %v535 = vpack.c.b16 %v427, %v423
    %v536 = vpack.c.b16 %v428, %v424
    %v537 = vpack.c.b16 %v429, %v425
    %v538 = vpack.c.b16 %v434, %v430
    %v539 = vpack.c.b16 %v435, %v431
    %v540 = vpack.c.b16 %v436, %v432
    %v541 = vpack.c.b16 %v437, %v433
    %v542 = vpack.c.b16 %v442, %v438
    %v543 = vpack.c.b16 %v443, %v439
    %v544 = vpack.c.b16 %v444, %v440
    %v545 = vpack.c.b16 %v445, %v441
    %v546 = vpack.c.b16 %v450, %v446
    %v547 = vpack.c.b16 %v451, %v447
    %v548 = vpack.c.b16 %v452, %v448
    %v549 = vpack.c.b16 %v453, %v449
    %646 = vmatpush.bf16.msra.mxu0 %v482
    %647 = vmatpush.bf16.msra.mxu0 %v478
    %648 = vmatpush.bf16.msra.mxu0 %v474
    %649 = vmatpush.bf16.msra.mxu0 %v470
    %650 = vmatpush.bf16.msra.mxu0 %v466
    %651 = vmatpush.bf16.msra.mxu0 %v462
    %652 = vmatpush.bf16.msra.mxu0 %v458
    %653 = vmatpush.bf16.msra.mxu0 %v454
    %654 = vmatmul.bf16.gmra.mxu0 %v56
    %v655 = vpop.f32.mrf.mxu0
    %v656 = vadd.f32 0.0, %v655
    %v657 = vpop.f32.mrf.mxu0
    %v658 = vadd.f32 0.0, %v657
    %659 = vdwg.mxu0
    %660 = vmatpush.bf16.msra.mxu0 %v514
    %661 = vmatpush.bf16.msra.mxu0 %v510
    %662 = vmatpush.bf16.msra.mxu0 %v506
    %663 = vmatpush.bf16.msra.mxu0 %v502
    %664 = vmatpush.bf16.msra.mxu0 %v498
    %665 = vmatpush.bf16.msra.mxu0 %v494
    %666 = vmatpush.bf16.msra.mxu0 %v490
    %667 = vmatpush.bf16.msra.mxu0 %v486
    %668 = vmatmul.bf16.gmra.mxu0 %v62
    %v669 = vpop.f32.mrf.mxu0
    %v670 = vadd.f32 %v656, %v669
    %v671 = vpop.f32.mrf.mxu0
    %v672 = vadd.f32 %v658, %v671
    %673 = vdwg.mxu0
    %674 = vmatpush.bf16.msra.mxu0 %v546
    %675 = vmatpush.bf16.msra.mxu0 %v542
    %676 = vmatpush.bf16.msra.mxu0 %v538
    %677 = vmatpush.bf16.msra.mxu0 %v534
    %678 = vmatpush.bf16.msra.mxu0 %v530
    %679 = vmatpush.bf16.msra.mxu0 %v526
    %680 = vmatpush.bf16.msra.mxu0 %v522
    %681 = vmatpush.bf16.msra.mxu0 %v518
    %682 = vmatmul.bf16.gmra.mxu0 %v68
    %v683 = vpop.f32.mrf.mxu0
    %v684 = vadd.f32 %v670, %v683
    %v685 = vpop.f32.mrf.mxu0
    %v686 = vadd.f32 %v672, %v685
    %687 = vdwg.mxu0
    %688 = vmatpush.bf16.msra.mxu0 %v483
    %689 = vmatpush.bf16.msra.mxu0 %v479
    %690 = vmatpush.bf16.msra.mxu0 %v475
    %691 = vmatpush.bf16.msra.mxu0 %v471
    %692 = vmatpush.bf16.msra.mxu0 %v467
    %693 = vmatpush.bf16.msra.mxu0 %v463
    %694 = vmatpush.bf16.msra.mxu0 %v459
    %695 = vmatpush.bf16.msra.mxu0 %v455
    %696 = vmatmul.bf16.gmra.mxu0 %v56
    %v697 = vpop.f32.mrf.mxu0
    %v698 = vadd.f32 0.0, %v697
    %v699 = vpop.f32.mrf.mxu0
    %v700 = vadd.f32 0.0, %v699
    %701 = vdwg.mxu0
    %702 = vmatpush.bf16.msra.mxu0 %v515
    %703 = vmatpush.bf16.msra.mxu0 %v511
    %704 = vmatpush.bf16.msra.mxu0 %v507
    %705 = vmatpush.bf16.msra.mxu0 %v503
    %706 = vmatpush.bf16.msra.mxu0 %v499
    %707 = vmatpush.bf16.msra.mxu0 %v495
    %708 = vmatpush.bf16.msra.mxu0 %v491
    %709 = vmatpush.bf16.msra.mxu0 %v487
    %710 = vmatmul.bf16.gmra.mxu0 %v62
    %v711 = vpop.f32.mrf.mxu0
    %v712 = vadd.f32 %v698, %v711
    %v713 = vpop.f32.mrf.mxu0
    %v714 = vadd.f32 %v700, %v713
    %715 = vdwg.mxu0
    %716 = vmatpush.bf16.msra.mxu0 %v547
    %717 = vmatpush.bf16.msra.mxu0 %v543
    %718 = vmatpush.bf16.msra.mxu0 %v539
    %719 = vmatpush.bf16.msra.mxu0 %v535
    %720 = vmatpush.bf16.msra.mxu0 %v531
    %721 = vmatpush.bf16.msra.mxu0 %v527
    %722 = vmatpush.bf16.msra.mxu0 %v523
    %723 = vmatpush.bf16.msra.mxu0 %v519
    %724 = vmatmul.bf16.gmra.mxu0 %v68
    %v725 = vpop.f32.mrf.mxu0
    %v726 = vadd.f32 %v712, %v725
    %v727 = vpop.f32.mrf.mxu0
    %v728 = vadd.f32 %v714, %v727
    %729 = vdwg.mxu0
    %730 = vmatpush.bf16.msra.mxu0 %v484
    %731 = vmatpush.bf16.msra.mxu0 %v480
    %732 = vmatpush.bf16.msra.mxu0 %v476
    %733 = vmatpush.bf16.msra.mxu0 %v472
    %734 = vmatpush.bf16.msra.mxu0 %v468
    %735 = vmatpush.bf16.msra.mxu0 %v464
    %736 = vmatpush.bf16.msra.mxu0 %v460
    %737 = vmatpush.bf16.msra.mxu0 %v456
    %738 = vmatmul.bf16.gmra.mxu0 %v56
    %v739 = vpop.f32.mrf.mxu0
    %v740 = vadd.f32 0.0, %v739
    %v741 = vpop.f32.mrf.mxu0
    %v742 = vadd.f32 0.0, %v741
    %743 = vdwg.mxu0
    %744 = vmatpush.bf16.msra.mxu0 %v516
    %745 = vmatpush.bf16.msra.mxu0 %v512
    %746 = vmatpush.bf16.msra.mxu0 %v508
    %747 = vmatpush.bf16.msra.mxu0 %v504
    %748 = vmatpush.bf16.msra.mxu0 %v500
    %749 = vmatpush.bf16.msra.mxu0 %v496
    %750 = vmatpush.bf16.msra.mxu0 %v492
    %751 = vmatpush.bf16.msra.mxu0 %v488
    %752 = vmatmul.bf16.gmra.mxu0 %v62
    %v753 = vpop.f32.mrf.mxu0
    %v754 = vadd.f32 %v740, %v753
    %v755 = vpop.f32.mrf.mxu0
    %v756 = vadd.f32 %v742, %v755
    %757 = vdwg.mxu0
    %758 = vmatpush.bf16.msra.mxu0 %v548
    %759 = vmatpush.bf16.msra.mxu0 %v544
    %760 = vmatpush.bf16.msra.mxu0 %v540
    %761 = vmatpush.bf16.msra.mxu0 %v536
    %762 = vmatpush.bf16.msra.mxu0 %v532
    %763 = vmatpush.bf16.msra.mxu0 %v528
    %764 = vmatpush.bf16.msra.mxu0 %v524
    %765 = vmatpush.bf16.msra.mxu0 %v520
    %766 = vmatmul.bf16.gmra.mxu0 %v68
    %v767 = vpop.f32.mrf.mxu0
    %v768 = vadd.f32 %v754, %v767
    %v769 = vpop.f32.mrf.mxu0
    %v770 = vadd.f32 %v756, %v769
    %771 = vdwg.mxu0
    %772 = vmatpush.bf16.msra.mxu0 %v485
    %773 = vmatpush.bf16.msra.mxu0 %v481
    %774 = vmatpush.bf16.msra.mxu0 %v477
    %775 = vmatpush.bf16.msra.mxu0 %v473
    %776 = vmatpush.bf16.msra.mxu0 %v469
    %777 = vmatpush.bf16.msra.mxu0 %v465
    %778 = vmatpush.bf16.msra.mxu0 %v461
    %779 = vmatpush.bf16.msra.mxu0 %v457
    %780 = vmatmul.bf16.gmra.mxu0 %v56
    %v781 = vpop.f32.mrf.mxu0
    %v782 = vadd.f32 0.0, %v781
    %v783 = vpop.f32.mrf.mxu0
    %v784 = vadd.f32 0.0, %v783
    %785 = vdwg.mxu0
    %786 = vmatpush.bf16.msra.mxu0 %v517
    %787 = vmatpush.bf16.msra.mxu0 %v513
    %788 = vmatpush.bf16.msra.mxu0 %v509
    %789 = vmatpush.bf16.msra.mxu0 %v505
    %790 = vmatpush.bf16.msra.mxu0 %v501
    %791 = vmatpush.bf16.msra.mxu0 %v497
    %792 = vmatpush.bf16.msra.mxu0 %v493
    %793 = vmatpush.bf16.msra.mxu0 %v489
    %794 = vmatmul.bf16.gmra.mxu0 %v62
    %v795 = vpop.f32.mrf.mxu0
    %v796 = vadd.f32 %v782, %v795
    %v797 = vpop.f32.mrf.mxu0
    %v798 = vadd.f32 %v784, %v797
    %799 = vdwg.mxu0
    %800 = vmatpush.bf16.msra.mxu0 %v549
    %801 = vmatpush.bf16.msra.mxu0 %v545
    %802 = vmatpush.bf16.msra.mxu0 %v541
    %803 = vmatpush.bf16.msra.mxu0 %v537
    %804 = vmatpush.bf16.msra.mxu0 %v533
    %805 = vmatpush.bf16.msra.mxu0 %v529
    %806 = vmatpush.bf16.msra.mxu0 %v525
    %807 = vmatpush.bf16.msra.mxu0 %v521
    %808 = vmatmul.bf16.gmra.mxu0 %v68
    %v809 = vpop.f32.mrf.mxu0
    %v810 = vadd.f32 %v796, %v809
    %v811 = vpop.f32.mrf.mxu0
    %v812 = vadd.f32 %v798, %v811
    %813 = vdwg.mxu0
    %v814 = vmul.f32 %v684, 0.2
    %v815 = vmul.f32 %v726, 0.2
    %v816 = vmul.f32 %v768, 0.2
    %v817 = vmul.f32 %v810, 0.2
    %v818 = vmul.f32 %v686, 0.2
    %v819 = vmul.f32 %v728, 0.2
    %v820 = vmul.f32 %v770, 0.2
    %v821 = vmul.f32 %v812, 0.2
    %v822 = vmax.f32 %v684, %v814
    %v823 = vmax.f32 %v726, %v815
    %v824 = vmax.f32 %v768, %v816
    %v825 = vmax.f32 %v810, %v817
    %v826 = vmax.f32 %v686, %v818
    %v827 = vmax.f32 %v728, %v819
    %v828 = vmax.f32 %v770, %v820
    %v829 = vmax.f32 %v812, %v821
    %v830 = vxor.u32 %v822, 2147483648
    %v831 = vxor.u32 %v826, 2147483648
    %v832 = vmul.f32 %v830, 1.442695
    %v833 = vpow.pop %v832
    %v834 = vmul.f32 %v831, 1.442695
    %v835 = vpow.pop %v834
    %v836 = vadd.f32 %v833, 1.0
    %v837 = vadd.f32 %v835, 1.0
    %v838 = vrcp.pop %v836
    %v839 = vmul.f32 %v836, %v838
    %v840 = vsub.f32 1.0, %v839
    %v841 = vmul.f32 %v838, %v840
    %v842 = vadd.f32 %v838, %v841
    %vm843 = vweird.f32 %v836
    %vm844 = vweird.f32 %v838
    %vm845 = vmor %vm843, %vm844
    %v846 = vsel %vm845, %v838, %v842
    %v847 = vand.u32 2147483647, %v836
    %vm848 = vcmp.eq.f32.partialorder %v847, 8.507059e+37
    %v849 = vand.u32 %v836, 2147483648
    %v850 = vor.u32 1.1754944e-38, %v849
    %v851 = vsel %vm848, %v850, %v846
    %v852 = vmul.f32 1.0, %v851
    %v853 = vrcp.pop %v837
    %v854 = vmul.f32 %v837, %v853
    %v855 = vsub.f32 1.0, %v854
    %v856 = vmul.f32 %v853, %v855
    %v857 = vadd.f32 %v853, %v856
    %vm858 = vweird.f32 %v837
    %vm859 = vweird.f32 %v853
    %vm860 = vmor %vm858, %vm859
    %v861 = vsel %vm860, %v853, %v857
    %v862 = vand.u32 2147483647, %v837
    %vm863 = vcmp.eq.f32.partialorder %v862, 8.507059e+37
    %v864 = vand.u32 %v837, 2147483648
    %v865 = vor.u32 1.1754944e-38, %v864
    %v866 = vsel %vm863, %v865, %v861
    %v867 = vmul.f32 1.0, %v866
    %v868 = vxor.u32 %v823, 2147483648
    %v869 = vxor.u32 %v827, 2147483648
    %v870 = vmul.f32 %v868, 1.442695
    %v871 = vpow.pop %v870
    %v872 = vmul.f32 %v869, 1.442695
    %v873 = vpow.pop %v872
    %v874 = vadd.f32 %v871, 1.0
    %v875 = vadd.f32 %v873, 1.0
    %v876 = vrcp.pop %v874
    %v877 = vmul.f32 %v874, %v876
    %v878 = vsub.f32 1.0, %v877
    %v879 = vmul.f32 %v876, %v878
    %v880 = vadd.f32 %v876, %v879
    %vm881 = vweird.f32 %v874
    %vm882 = vweird.f32 %v876
    %vm883 = vmor %vm881, %vm882
    %v884 = vsel %vm883, %v876, %v880
    %v885 = vand.u32 2147483647, %v874
    %vm886 = vcmp.eq.f32.partialorder %v885, 8.507059e+37
    %v887 = vand.u32 %v874, 2147483648
    %v888 = vor.u32 1.1754944e-38, %v887
    %v889 = vsel %vm886, %v888, %v884
    %v890 = vmul.f32 1.0, %v889
    %v891 = vrcp.pop %v875
    %v892 = vmul.f32 %v875, %v891
    %v893 = vsub.f32 1.0, %v892
    %v894 = vmul.f32 %v891, %v893
    %v895 = vadd.f32 %v891, %v894
    %vm896 = vweird.f32 %v875
    %vm897 = vweird.f32 %v891
    %vm898 = vmor %vm896, %vm897
    %v899 = vsel %vm898, %v891, %v895
    %v900 = vand.u32 2147483647, %v875
    %vm901 = vcmp.eq.f32.partialorder %v900, 8.507059e+37
    %v902 = vand.u32 %v875, 2147483648
    %v903 = vor.u32 1.1754944e-38, %v902
    %v904 = vsel %vm901, %v903, %v899
    %v905 = vmul.f32 1.0, %v904
    %v906 = vtanh.pop %v824
    %v907 = vtanh.pop %v828
    %v908 = vxor.u32 %v825, 2147483648
    %v909 = vxor.u32 %v829, 2147483648
    %v910 = vmul.f32 %v908, 1.442695
    %v911 = vpow.pop %v910
    %v912 = vmul.f32 %v909, 1.442695
    %v913 = vpow.pop %v912
    %v914 = vadd.f32 %v911, 1.0
    %v915 = vadd.f32 %v913, 1.0
    %v916 = vrcp.pop %v914
    %v917 = vmul.f32 %v914, %v916
    %v918 = vsub.f32 1.0, %v917
    %v919 = vmul.f32 %v916, %v918
    %v920 = vadd.f32 %v916, %v919
    %vm921 = vweird.f32 %v914
    %vm922 = vweird.f32 %v916
    %vm923 = vmor %vm921, %vm922
    %v924 = vsel %vm923, %v916, %v920
    %v925 = vand.u32 2147483647, %v914
    %vm926 = vcmp.eq.f32.partialorder %v925, 8.507059e+37
    %v927 = vand.u32 %v914, 2147483648
    %v928 = vor.u32 1.1754944e-38, %v927
    %v929 = vsel %vm926, %v928, %v924
    %v930 = vmul.f32 1.0, %v929
    %v931 = vrcp.pop %v915
    %v932 = vmul.f32 %v915, %v931
    %v933 = vsub.f32 1.0, %v932
    %v934 = vmul.f32 %v931, %v933
    %v935 = vadd.f32 %v931, %v934
    %vm936 = vweird.f32 %v915
    %vm937 = vweird.f32 %v931
    %vm938 = vmor %vm936, %vm937
    %v939 = vsel %vm938, %v931, %v935
    %v940 = vand.u32 2147483647, %v915
    %vm941 = vcmp.eq.f32.partialorder %v940, 8.507059e+37
    %v942 = vand.u32 %v915, 2147483648
    %v943 = vor.u32 1.1754944e-38, %v942
    %v944 = vsel %vm941, %v943, %v939
    %v945 = vmul.f32 1.0, %v944
    %v946 = vld [vmem:[%s3] sm:$0xff]
    %v947 = vld [vmem:[%s3 + $0x8] sm:$0xff]
    %v948 = vmul.f32 %v946, %v852
    %v949 = vmul.f32 %v947, %v867
    %v950 = vmul.f32 %v890, %v906
    %v951 = vmul.f32 %v905, %v907
    %v952 = vadd.f32 %v948, %v950
    %v953 = vadd.f32 %v949, %v951
    %v954 = vtanh.pop %v952
    %v955 = vtanh.pop %v953
    %v956 = vmul.f32 %v954, %v930
    %v957 = vmul.f32 %v955, %v945
    %958 = vst [vmem:[%s8] sm:$0xff] %v952
    %959 = vst [vmem:[%s8 + $0x8] sm:$0xff] %v953
    %v960 = vpack.c.bf16 %v956, %v956
    %v961 = vpack.c.bf16 %v957, %v957
    %962 = vst [vmem:[%s9] sm:$0xf] %v960
    %963 = vst [vmem:[%s9 + $0x4] sm:$0xf] %v961
    %v964 = vld [vmem:[%s5] sm:$0xf]
    %v965 = vld [vmem:[%s5 + $0x4] sm:$0xf]
    %v966 = vld [vmem:[%s5 + $0x8] sm:$0xf]
    %v967 = vld [vmem:[%s5 + $0xc] sm:$0xf]
    %v968 = vld [vmem:[%s5 + $0x10] sm:$0xf]
    %v969 = vld [vmem:[%s5 + $0x14] sm:$0xf]
    %v970 = vld [vmem:[%s5 + $0x18] sm:$0xf]
    %v971 = vld [vmem:[%s5 + $0x1c] sm:$0xf]
    %v972 = vld [vmem:[%s5 + $0x20] sm:$0xf]
    %v973 = vld [vmem:[%s5 + $0x24] sm:$0xf]
    %v974 = vld [vmem:[%s5 + $0x28] sm:$0xf]
    %v975 = vld [vmem:[%s5 + $0x2c] sm:$0xf]
    %v976 = vld [vmem:[%s5 + $0x30] sm:$0xf]
    %v977 = vld [vmem:[%s5 + $0x34] sm:$0xf]
    %v978 = vld [vmem:[%s5 + $0x38] sm:$0xf]
    %v979 = vld [vmem:[%s5 + $0x3c] sm:$0xf]
    %v980 = vld [vmem:[%s6] sm:$0x1]
    %v981 = vperm.slane %v980, 0
    %v984 = vunpack.c.l.b16 %v960
    %v985 = vunpack.c.l.b16 %v961
    %v986 = vpack.c.b16 %v985, %v984
    %v1004 = vunpack.c.l.b16 %v964
    %v1005 = vunpack.c.l.b16 %v965
    %v1006 = vunpack.c.l.b16 %v966
    %v1007 = vunpack.c.l.b16 %v967
    %v1008 = vunpack.c.l.b16 %v968
    %v1009 = vunpack.c.l.b16 %v969
    %v1010 = vunpack.c.l.b16 %v970
    %v1011 = vunpack.c.l.b16 %v971
    %v1012 = vunpack.c.l.b16 %v972
    %v1013 = vunpack.c.l.b16 %v973
    %v1014 = vunpack.c.l.b16 %v974
    %v1015 = vunpack.c.l.b16 %v975
    %v1016 = vunpack.c.l.b16 %v976
    %v1017 = vunpack.c.l.b16 %v977
    %v1018 = vunpack.c.l.b16 %v978
    %v1019 = vunpack.c.l.b16 %v979
    %v1020 = vpack.c.b16 %v1005, %v1004
    %v1021 = vpack.c.b16 %v1007, %v1006
    %v1022 = vpack.c.b16 %v1009, %v1008
    %v1023 = vpack.c.b16 %v1011, %v1010
    %v1024 = vpack.c.b16 %v1013, %v1012
    %v1025 = vpack.c.b16 %v1015, %v1014
    %v1026 = vpack.c.b16 %v1017, %v1016
    %v1027 = vpack.c.b16 %v1019, %v1018
    %1036 = vmatpush.bf16.msra.mxu0 %v1027
    %1037 = vmatpush.bf16.msra.mxu0 %v1026
    %1038 = vmatpush.bf16.msra.mxu0 %v1025
    %1039 = vmatpush.bf16.msra.mxu0 %v1024
    %1040 = vmatpush.bf16.msra.mxu0 %v1023
    %1041 = vmatpush.bf16.msra.mxu0 %v1022
    %1042 = vmatpush.bf16.msra.mxu0 %v1021
    %1043 = vmatpush.bf16.msra.mxu0 %v1020
    %1044 = vmatmul.bf16.gmra.mxu0 %v986
    %v1045 = vpop.f32.mrf.mxu0
    %v1046 = vadd.f32 %v981, %v1045
    %v1047 = vpop.f32.mrf.mxu0
    %v1048 = vadd.f32 %v981, %v1047
    %1049 = vdwg.mxu0
    %1050 = vst [vmem:[#allocation5] sm:$0xff] %v1046
    %1051 = vst [vmem:[#allocation5 + $0x8] sm:$0xff] %v1048
    // Predicated region
    $region34: #{_lambda_.1} parent=1 // pred_check
      _
    $region35: #{_lambda_.1} parent=1 // pred_check_branch
      %1053 = sbr.rel (0) target = $region37
    $region36: #{_lambda_.1} parent=1 // pred_region
      %1055 = vsyncadd [#allocation4], 0
      %s1056 = sshll.u32 [#allocation5], 4
      %s1057 = int_to_ptr.vmem [resolvable:$true] %s1056
      %s1058 = sshll.u32 %s7, 4
      %s1059 = int_to_ptr.hbm [resolvable:$true] %s1058
      %1064 = dma.vmem_to_hbm [thread:$0]  %s1057, 256, %s1059, [#allocation4], 128, 128, 8
    $region37: #{_lambda_.1} parent=1 // pred_fallthru
      _
    // Predicated region
    $region38: #{_lambda_.1} parent=1 // pred_check
      _
    $region39: #{_lambda_.1} parent=1 // pred_check_branch
      %1066 = sbr.rel (0) target = $region41
    $region40: #{_lambda_.1} parent=1 // pred_region
      _
    $region41: #{_lambda_.1} parent=1 // pred_fallthru
      _
    // Predicated region
    $region42: #{_lambda_.1} parent=1 // pred_check
      _
    $region43: #{_lambda_.1} parent=1 // pred_check_branch
      %1068 = sbr.rel (0) target = $region45
    $region44: #{_lambda_.1} parent=1 // pred_region
      _
    $region45: #{_lambda_.1} parent=1 // pred_fallthru
      _
    // Predicated region
    $region46: #{_lambda_.1} parent=1 // pred_check
      _
    $region47: #{_lambda_.1} parent=1 // pred_check_branch
      %1070 = sbr.rel (0) target = $region49
    $region48: #{_lambda_.1} parent=1 // pred_region
      %1072 = dma.done [#allocation4], 256
    $region49: #{_lambda_.1} parent=1 // pred_fallthru
      _
    // Predicated region
    $region50: #{_lambda_.1} parent=1 // pred_check
      _
    $region51: #{_lambda_.1} parent=1 // pred_check_branch
      %1074 = sbr.rel (0) target = $region53
    $region52: #{_lambda_.1} parent=1 // pred_region
      _
    $region53: #{_lambda_.1} parent=1 // pred_fallthru
      _
    // Predicated region
    $region54: #{_lambda_.1} parent=1 // pred_check
      _
    $region55: #{_lambda_.1} parent=1 // pred_check_branch
      %1076 = sbr.rel (0) target = $region57
    $region56: #{_lambda_.1} parent=1 // pred_region
      _
    $region57: #{_lambda_.1} parent=1 // pred_fallthru
      _
    %1077 = vsyncpa [#allocation3], 1
    %1078 = vsyncpa [#allocation4], 1

</llo_original>
